<compile_context>
chip_gen: v6e
topology: v6e:2x2x1
jax: 0.10.0
libtpu: 0.0.40
codegen_flags: <defaults>
</compile_context>

<pallas_src>
import functools

import jax
import jax.numpy as jnp
from jax import lax
from jax.experimental import pallas as pl
from jax.experimental.pallas import tpu as pltpu

_LANE = 128
_SUBLANE = 8
_VMEM_BUDGET = 24 * 1024 * 1024   # conservative: fits every generation's scoped VMEM


def _round_up(x, m):
    return ((x + m - 1) // m) * m


def _cdiv(a, b):
    return -(-a // b)


# ---------------------------------------------------------------------------
# Pallas kernels
# ---------------------------------------------------------------------------
def _conv_relu_maxpool_kernel(patches_ref, w_ref, b_ref, o_ref, *, n_pool):
    """Fused Conv2d -> ReLU -> MaxPool2d for one lane tile (channels-first).

    patches_ref: (n_pool, P, TILE_N) bf16, P = Cin*kh*kw, TILE_N rows of B*Hp*Wp
    w_ref:       (Cout_pad, P)       bf16  (resident)
    b_ref:       (Cout_pad, 1)       f32   (resident)
    o_ref:       (Cout_pad, TILE_N)  bf16
    """
    w = w_ref[...]
    # Issue all pool-tap matmuls first (independent 2-D dots -> MXU streams them
    # back-to-back, no VPU max on the MXU critical path), then reduce with an
    # independent VPU max pass.  Plain 2-D dots are kept (instead of a single
    # 3-D contraction) for robust Mosaic lowering; the dataflow is equivalent.
    taps = [jnp.dot(w, patches_ref[j], preferred_element_type=jnp.float32)
            for j in range(n_pool)]
    acc = taps[0]
    for t in taps[1:]:
        acc = jnp.maximum(acc, t)
    # ONE bias-add + ReLU after the pool max (exact: ReLU monotone, bias const).
    o_ref[...] = jnp.maximum(acc + b_ref[...], 0.0).astype(o_ref.dtype)


def _mlp_softmax_kernel(x_ref, w1_ref, b1_ref, w2_ref, b2_ref, o_ref):
    """fc1 -> ReLU -> fc2 -> softmax(dim=1) for one tile of batch rows.

    Hidden and class dims are padded to 128 lanes; padded fc2 columns carry a
    -1e30 bias so exp() underflows to exactly 0 and the real columns stay
    correctly normalized.  Output store is lane-dense (TILE_B, 128).
    """
    h = jnp.dot(x_ref[...], w1_ref[...], preferred_element_type=jnp.float32)
    h = jnp.maximum(h + b1_ref[...], 0.0)
    z = jnp.dot(h.astype(w2_ref.dtype), w2_ref[...],
                preferred_element_type=jnp.float32) + b2_ref[...]
    z = z - jnp.max(z, axis=-1, keepdims=True)
    e = jnp.exp(z)
    # Exact normalization (the approximate reciprocal broke sum==1 within 1e-3).
    o_ref[...] = (e / jnp.sum(e, axis=-1, keepdims=True)).astype(o_ref.dtype)


# ---------------------------------------------------------------------------
# Glue: channels-first im2col with conv positions grouped by pooling tap.
# Only static strided slices (no XLA gather).
# ---------------------------------------------------------------------------
def _im2col_pool_grouped(x_cbhw, kh, kw, pad, stride, pk, ps):
    C, B, H, W = x_cbhw.shape
    xp = jnp.pad(x_cbhw, ((0, 0), (0, 0), (pad, pad), (pad, pad)))
    Ho = (H + 2 * pad - kh) // stride + 1
    Wo = (W + 2 * pad - kw) // stride + 1
    Hp = (Ho - pk) // ps + 1
    Wp = (Wo - pk) // ps + 1
    step = ps * stride
    groups = []
    for dh in range(pk):
        for dw in range(pk):
            taps = []
            for u in range(kh):
                for v in range(kw):
                    r0 = dh * stride + u
                    c0 = dw * stride + v
                    sl = lax.slice(
                        xp, (0, 0, r0, c0),
                        (C, B, r0 + (Hp - 1) * step + 1, c0 + (Wp - 1) * step + 1),
                        (1, 1, step, step))              # (C, B, Hp, Wp)
                    taps.append(sl)
            t = jnp.stack(taps, axis=1)                  # (C, kh*kw, B, Hp, Wp)
            groups.append(t.reshape(C * kh * kw, B * Hp * Wp))
    patches = jnp.stack(groups, axis=0)                  # (pk*pk, P, N)
    return patches, Hp, Wp


# ---------------------------------------------------------------------------
# Tile selection (lane-dense, >=2 grid steps for v7x, VMEM-budgeted,
# prefers tiles that divide N exactly so the patch tensor is not re-padded).
# ---------------------------------------------------------------------------
def _pick_tile_n(n, n_pool, p, cout_pad):
    n128 = _round_up(n, _LANE)
    if n128 <= _LANE:
        return n128, n128
    # double-buffered streamed bytes per lane column (bf16 patches + bf16 out)
    per_lane = 2 * (n_pool * _round_up(p, 16) + _round_up(cout_pad, 16)) * 2
    budget_tile = max(_LANE, (_VMEM_BUDGET // per_lane) // _LANE * _LANE)
    # >= 2 grid steps so v7x's second TensorCore gets work; cap lane tile at 1024
    max_tile = max(_LANE, min(1024, budget_tile, _round_up(_cdiv(n128, 2), _LANE)))
    best_div = _LANE
    for t in range(_LANE, max_tile + 1, _LANE):
        if n128 % t == 0:
            best_div = t
    if 2 * best_div >= max_tile:
        return best_div, n128                       # exact division: no re-pad copy
    return max_tile, _round_up(n128, max_tile)      # accept a small ragged tail pad


def _pick_tile_b(b):
    b8 = _round_up(b, _SUBLANE)
    if b8 <= _SUBLANE:
        return _SUBLANE
    # >= 2 grid steps when the batch allows it (v7x megacore), cap at 128 rows
    return max(_SUBLANE, min(128, _round_up(_cdiv(b8, 2), _SUBLANE)))


def _conv_vmem_estimate(n_pool, p, cout_pad, tile_n):
    patch_blk = n_pool * _round_up(p, 16) * tile_n * 2
    out_blk = _round_up(cout_pad, 16) * tile_n * 2
    resident = _round_up(cout_pad, 16) * _round_up(p, _LANE) * 2 + cout_pad * _LANE * 4
    return 2 * (patch_blk + out_blk) + resident     # double-buffered blocks + weights


# ---------------------------------------------------------------------------
# Wrappers
# ---------------------------------------------------------------------------
def conv_relu_maxpool(x_cbhw, w_mat, b_col, cout, *, kh, kw, stride, pad,
                      pool_k, pool_s):
    """x_cbhw: (Cin, B, H, W) bf16; w_mat: (Cout_pad, Cin*kh*kw) bf16 (prepped)."""
    cout_pad, P = w_mat.shape
    B = x_cbhw.shape[1]
    patches, Hp, Wp = _im2col_pool_grouped(x_cbhw, kh, kw, pad, stride, pool_k, pool_s)
    n_pool, P2, N = patches.shape
    assert P2 == P

    tile_n, n_pad = _pick_tile_n(N, n_pool, P, cout_pad)
    if n_pad != N:
        patches = jnp.pad(patches, ((0, 0), (0, 0), (0, n_pad - N)))

    compiler_kwargs = dict(dimension_semantics=("parallel",))
    if _conv_vmem_estimate(n_pool, P, cout_pad, tile_n) > 12 * 1024 * 1024:
        # v5e's default scoped VMEM is only 16 MiB; be explicit once tiles grow
        # (still well under v7x's 64 MiB physical VMEM).
        compiler_kwargs["vmem_limit_bytes"] = 48 * 1024 * 1024

    out = pl.pallas_call(
        functools.partial(_conv_relu_maxpool_kernel, n_pool=n_pool),
        out_shape=jax.ShapeDtypeStruct((cout_pad, n_pad), jnp.bfloat16),
        grid=(n_pad // tile_n,),
        in_specs=[
            pl.BlockSpec((n_pool, P, tile_n), lambda i: (0, 0, i)),   # streamed
            pl.BlockSpec((cout_pad, P), lambda i: (0, 0)),            # resident weights
            pl.BlockSpec((cout_pad, 1), lambda i: (0, 0)),            # resident bias
        ],
        out_specs=pl.BlockSpec((cout_pad, tile_n), lambda i: (0, i)),
        compiler_params=pltpu.CompilerParams(**compiler_kwargs),
    )(patches, w_mat, b_col)

    return out[:cout, :N].reshape(cout, B, Hp, Wp)


def mlp_softmax(x_flat, fc_prep, n_classes):
    w1t, b1p, w2t, b2p = fc_prep            # already transposed / padded / bf16
    B, F = x_flat.shape
    F_pad, H_pad = w1t.shape
    C_pad = w2t.shape[1]

    tile_b = _pick_tile_b(B)
    b_pad = _round_up(B, tile_b)
    if (b_pad, F_pad) != (B, F):
        x_flat = jnp.pad(x_flat, ((0, b_pad - B), (0, F_pad - F)))

    out = pl.pallas_call(
        _mlp_softmax_kernel,
        out_shape=jax.ShapeDtypeStruct((b_pad, C_pad), jnp.float32),
        grid=(b_pad // tile_b,),
        in_specs=[
            pl.BlockSpec((tile_b, F_pad), lambda i: (i, 0)),
            pl.BlockSpec((F_pad, H_pad), lambda i: (0, 0)),
            pl.BlockSpec((1, H_pad), lambda i: (0, 0)),
            pl.BlockSpec((H_pad, C_pad), lambda i: (0, 0)),
            pl.BlockSpec((1, C_pad), lambda i: (0, 0)),
        ],
        out_specs=pl.BlockSpec((tile_b, C_pad), lambda i: (i, 0)),
        compiler_params=pltpu.CompilerParams(dimension_semantics=("parallel",)),
    )(x_flat.astype(jnp.bfloat16), w1t, b1p, w2t, b2p)
    return out[:B, :n_classes]


# ---------------------------------------------------------------------------
# One-time weight relayout, hoisted out of the jitted forward.
# ---------------------------------------------------------------------------
def prepare_params(params, cfg):
    prep = {"conv": []}
    for i in range(cfg["n_layers"]):
        w = params[f"conv{i + 1}_w"]                 # (Cout, Cin, k, k)
        b = params[f"conv{i + 1}_b"]                 # (Cout,)
        cout, cin, kh, kw = w.shape
        p = cin * kh * kw
        cout_pad = _round_up(cout, _SUBLANE)
        w_mat = w.reshape(cout, p)
        if cout_pad != cout:
            w_mat = jnp.pad(w_mat, ((0, cout_pad - cout), (0, 0)))
            b = jnp.pad(b, (0, cout_pad - cout))
        prep["conv"].append((w_mat.astype(jnp.bfloat16),
                             b.reshape(cout_pad, 1).astype(jnp.float32)))

    w1, b1 = params["fc1_w"], params["fc1_b"]        # (Hdim, F), (Hdim,)
    w2, b2 = params["fc2_w"], params["fc2_b"]        # (nC, Hdim), (nC,)
    hdim, f = w1.shape
    nc = w2.shape[0]
    f_pad = _round_up(f, _LANE)
    h_pad = _round_up(hdim, _LANE)
    c_pad = _round_up(nc, _LANE)
    w1t = jnp.zeros((f_pad, h_pad), jnp.float32).at[:f, :hdim].set(w1.T)
    b1p = jnp.zeros((1, h_pad), jnp.float32).at[0, :hdim].set(b1)
    w2t = jnp.zeros((h_pad, c_pad), jnp.float32).at[:hdim, :nc].set(w2.T)
    # padded logit columns get a large finite negative bias -> softmax prob == 0
    b2p = jnp.full((1, c_pad), -1e30, jnp.float32).at[0, :nc].set(b2)
    prep["fc"] = (w1t.astype(jnp.bfloat16), b1p, w2t.astype(jnp.bfloat16), b2p)
    return prep


# ---------------------------------------------------------------------------
# Full forward pass (== SimpleCNN.forward)
# ---------------------------------------------------------------------------
def simple_cnn_forward(x_nchw, prep, cfg):
    # NCHW -> CNHW (channels on sublanes, batch*spatial on lanes), bf16 streaming.
    x = jnp.transpose(x_nchw, (1, 0, 2, 3)).astype(jnp.bfloat16)
    for i in range(cfg["n_layers"]):
        w_mat, b_col = prep["conv"][i]
        k = cfg["list_kernels"][i]
        x = conv_relu_maxpool(
            x, w_mat, b_col, cfg["channel_list"][i],
            kh=k, kw=k, stride=cfg["list_strides"][i], pad=cfg["list_paddings"][i],
            pool_k=cfg["list_pool_kernels"][i], pool_s=cfg["list_pool_strides"][i])
    Cf, B, Hf, Wf = x.shape
    # PyTorch x.view(-1, C*H*W): per-batch features are already (C, H, W)-ordered
    # in CNHW; only the tiny batch axis has to move to the front.
    x_flat = jnp.transpose(x, (1, 0, 2, 3)).reshape(B, Cf * Hf * Wf)
    return mlp_softmax(x_flat, prep["fc"], cfg["n_classes"])


# ---------------------------------------------------------------------------
# Deterministic parameter init + pure-JAX f32 reference
# ---------------------------------------------------------------------------
def _flattened_dim(cfg, h, w):
    for i in range(cfg["n_layers"]):
        k, p, s = cfg["list_kernels"][i], cfg["list_paddings"][i], cfg["list_strides"][i]
        h = (h + 2 * p - k) // s + 1
        w = (w + 2 * p - k) // s + 1
        pk, ps = cfg["list_pool_kernels"][i], cfg["list_pool_strides"][i]
        h = (h - pk) // ps + 1
        w = (w - pk) // ps + 1
    return cfg["channel_list"][-1] * h * w


def init_params(cfg, key, h, w):
    # TODO(synk): PyTorch re-creates fc1/fc2 with fresh random init on every
    # forward call; here they are initialized once, deterministically.
    params = {}
    keys = jax.random.split(key, 2 * cfg["n_layers"] + 4)
    kidx = 0
    in_c = 1
    for i in range(cfg["n_layers"]):
        out_c = cfg["channel_list"][i]
        k = cfg["list_kernels"][i]
        params[f"conv{i + 1}_w"] = 0.1 * jax.random.normal(
            keys[kidx], (out_c, in_c, k, k), jnp.float32); kidx += 1
        if cfg["bias_list"][i]:
            params[f"conv{i + 1}_b"] = 0.1 * jax.random.normal(keys[kidx], (out_c,), jnp.float32)
        else:
            params[f"conv{i + 1}_b"] = jnp.zeros((out_c,), jnp.float32)
        kidx += 1
        in_c = out_c
    F = _flattened_dim(cfg, h, w)
    params["fc1_w"] = 0.1 * jax.random.normal(keys[kidx], (cfg["features_lineales"], F), jnp.float32); kidx += 1
    params["fc1_b"] = 0.1 * jax.random.normal(keys[kidx], (cfg["features_lineales"],), jnp.float32); kidx += 1
    params["fc2_w"] = 0.1 * jax.random.normal(keys[kidx], (cfg["n_classes"], cfg["features_lineales"]), jnp.float32); kidx += 1
    params["fc2_b"] = 0.1 * jax.random.normal(keys[kidx], (cfg["n_classes"],), jnp.float32)
    return params


def reference_forward(x_nchw, params, cfg):
    x = x_nchw.astype(jnp.float32)
    for i in range(cfg["n_layers"]):
        w = params[f"conv{i + 1}_w"]
        b = params[f"conv{i + 1}_b"]
        s, p = cfg["list_strides"][i], cfg["list_paddings"][i]
        x = lax.conv_general_dilated(x, w, (s, s), [(p, p), (p, p)],
                                     dimension_numbers=("NCHW", "OIHW", "NCHW"))
        x = jnp.maximum(x + b.reshape(1, -1, 1, 1), 0.0)
        pk, ps = cfg["list_pool_kernels"][i], cfg["list_pool_strides"][i]
        x = lax.reduce_window(x, -jnp.inf, lax.max, (1, 1, pk, pk), (1, 1, ps, ps), "VALID")
    B = x.shape[0]
    x = x.reshape(B, -1)
    x = jnp.maximum(x @ params["fc1_w"].T + params["fc1_b"], 0.0)
    x = x @ params["fc2_w"].T + params["fc2_b"]
    return jax.nn.softmax(x, axis=1)


if __name__ == "__main__":
    cfg = dict(
        n_layers=2,
        n_classes=4,
        list_kernels=[3, 3],
        list_paddings=[1, 1],
        channel_list=[4, 8],
        bias_list=[True, True],
        list_strides=[1, 1],
        features_lineales=32,
        list_pool_kernels=[2, 2],
        list_pool_strides=[2, 2],
    )
    key = jax.random.PRNGKey(0)
    k_x, k_p = jax.random.split(key)
    # nn.Conv2d(1, ...) for the first layer -> single input channel, NCHW
    x = jax.random.normal(k_x, (2, 1, 16, 16), jnp.float32)
    params = init_params(cfg, k_p, h=16, w=16)
    prep = prepare_params(params, cfg)          # one-time weight relayout, outside jit

    fwd = jax.jit(functools.partial(simple_cnn_forward, cfg=cfg))
    out = jax.block_until_ready(fwd(x, prep))

    ref = reference_forward(x, params, cfg)
    assert out.shape == (2, cfg["n_classes"])
    assert jnp.allclose(jnp.sum(out, axis=1), 1.0, atol=1e-3)
    assert jnp.allclose(out, ref, atol=2.5e-2, rtol=2e-2)   # bf16 streaming vs f32 ref
    print("KERNEL_OK")
</pallas_src>

<mosaic_0001>
module attributes {stable_mosaic.version = 11 : i64} {
  func.func @_conv_relu_maxpool_kernel(%arg0: i32, %arg1: memref<4x9x128xbf16, #tpu.memory_space<vmem>>, %arg2: memref<8x9xbf16, #tpu.memory_space<vmem>>, %arg3: memref<8x1xf32, #tpu.memory_space<vmem>>, %arg4: memref<8x128xbf16, #tpu.memory_space<vmem>>) attributes {dimension_semantics = [#tpu.dimension_semantics<parallel>], iteration_bounds = array<i64: 1>, scalar_prefetch = 0 : i64, scratch_operands = 0 : i64, tpu.core_type = #tpu.core_type<tc>, window_params = [{transform_indices = @transform_0, window_bounds = array<i64: 4, 9, 128>}, {pipeline_mode = #tpu.pipeline_mode<synchronous>, transform_indices = @transform_1, window_bounds = array<i64: 8, 9>}, {pipeline_mode = #tpu.pipeline_mode<synchronous>, transform_indices = @transform_2, window_bounds = array<i64: 8, 1>}, {transform_indices = @transform_3, window_bounds = array<i64: 8, 128>}]} {
    %c0 = arith.constant 0 : index
    %c0_0 = arith.constant 0 : index
    %0 = vector.load %arg2[%c0, %c0_0] : memref<8x9xbf16, #tpu.memory_space<vmem>>, vector<8x9xbf16>
    %c0_1 = arith.constant 0 : index
    %c0_2 = arith.constant 0 : index
    %c0_3 = arith.constant 0 : index
    %1 = vector.load %arg1[%c0_1, %c0_2, %c0_3] : memref<4x9x128xbf16, #tpu.memory_space<vmem>>, vector<1x9x128xbf16>
    %2 = vector.shape_cast %1 : vector<1x9x128xbf16> to vector<9x128xbf16>
    %cst = arith.constant dense<0.000000e+00> : vector<8x128xf32>
    %3 = tpu.matmul %0, %2, %cst {dimension_numbers = #tpu.dot_dimension_numbers<[1], [0], [0], [1], [0, 0, 1, 1], [], []>} : vector<8x9xbf16>, vector<9x128xbf16>, vector<8x128xf32> -> vector<8x128xf32>
    %c1 = arith.constant 1 : index
    %c0_4 = arith.constant 0 : index
    %c0_5 = arith.constant 0 : index
    %4 = vector.load %arg1[%c1, %c0_4, %c0_5] : memref<4x9x128xbf16, #tpu.memory_space<vmem>>, vector<1x9x128xbf16>
    %5 = vector.shape_cast %4 : vector<1x9x128xbf16> to vector<9x128xbf16>
    %cst_6 = arith.constant dense<0.000000e+00> : vector<8x128xf32>
    %6 = tpu.matmul %0, %5, %cst_6 {dimension_numbers = #tpu.dot_dimension_numbers<[1], [0], [0], [1], [0, 0, 1, 1], [], []>} : vector<8x9xbf16>, vector<9x128xbf16>, vector<8x128xf32> -> vector<8x128xf32>
    %c2 = arith.constant 2 : index
    %c0_7 = arith.constant 0 : index
    %c0_8 = arith.constant 0 : index
    %7 = vector.load %arg1[%c2, %c0_7, %c0_8] : memref<4x9x128xbf16, #tpu.memory_space<vmem>>, vector<1x9x128xbf16>
    %8 = vector.shape_cast %7 : vector<1x9x128xbf16> to vector<9x128xbf16>
    %cst_9 = arith.constant dense<0.000000e+00> : vector<8x128xf32>
    %9 = tpu.matmul %0, %8, %cst_9 {dimension_numbers = #tpu.dot_dimension_numbers<[1], [0], [0], [1], [0, 0, 1, 1], [], []>} : vector<8x9xbf16>, vector<9x128xbf16>, vector<8x128xf32> -> vector<8x128xf32>
    %c3 = arith.constant 3 : index
    %c0_10 = arith.constant 0 : index
    %c0_11 = arith.constant 0 : index
    %10 = vector.load %arg1[%c3, %c0_10, %c0_11] : memref<4x9x128xbf16, #tpu.memory_space<vmem>>, vector<1x9x128xbf16>
    %11 = vector.shape_cast %10 : vector<1x9x128xbf16> to vector<9x128xbf16>
    %cst_12 = arith.constant dense<0.000000e+00> : vector<8x128xf32>
    %12 = tpu.matmul %0, %11, %cst_12 {dimension_numbers = #tpu.dot_dimension_numbers<[1], [0], [0], [1], [0, 0, 1, 1], [], []>} : vector<8x9xbf16>, vector<9x128xbf16>, vector<8x128xf32> -> vector<8x128xf32>
    %13 = arith.maximumf %3, %6 : vector<8x128xf32>
    %14 = arith.maximumf %13, %9 : vector<8x128xf32>
    %15 = arith.maximumf %14, %12 : vector<8x128xf32>
    %c0_13 = arith.constant 0 : index
    %c0_14 = arith.constant 0 : index
    %16 = vector.load %arg3[%c0_13, %c0_14] : memref<8x1xf32, #tpu.memory_space<vmem>>, vector<8x1xf32>
    %17 = vector.broadcast %16 : vector<8x1xf32> to vector<8x128xf32>
    %18 = arith.addf %15, %17 : vector<8x128xf32>
    %cst_15 = arith.constant 0.000000e+00 : f32
    %19 = vector.broadcast %cst_15 : f32 to vector<8x128xf32>
    %20 = arith.maximumf %18, %19 : vector<8x128xf32>
    %21 = arith.truncf %20 : vector<8x128xf32> to vector<8x128xbf16>
    %c0_16 = arith.constant 0 : index
    %c0_17 = arith.constant 0 : index
    %22 = vector.load %arg4[%c0_16, %c0_17] : memref<8x128xbf16, #tpu.memory_space<vmem>>, vector<8x128xbf16>
    tpu.vector_store %arg4[%c0_16, %c0_17], %21 {strides = array<i32>} : memref<8x128xbf16, #tpu.memory_space<vmem>>, vector<8x128xbf16>,
    return
  }
  func.func @transform_0(%arg0: i32) -> (i32, i32, i32) {
    %c0_i32 = arith.constant 0 : i32
    %c0_i32_0 = arith.constant 0 : i32
    %c0_i32_1 = arith.constant 0 : i32
    return %c0_i32, %c0_i32_0, %arg0 : i32, i32, i32
  }
  func.func @transform_1(%arg0: i32) -> (i32, i32) {
    %c0_i32 = arith.constant 0 : i32
    %c0_i32_0 = arith.constant 0 : i32
    %c0_i32_1 = arith.constant 0 : i32
    return %c0_i32, %c0_i32_0 : i32, i32
  }
  func.func @transform_2(%arg0: i32) -> (i32, i32) {
    %c0_i32 = arith.constant 0 : i32
    %c0_i32_0 = arith.constant 0 : i32
    %c0_i32_1 = arith.constant 0 : i32
    return %c0_i32, %c0_i32_0 : i32, i32
  }
  func.func @transform_3(%arg0: i32) -> (i32, i32) {
    %c0_i32 = arith.constant 0 : i32
    %c0_i32_0 = arith.constant 0 : i32
    return %c0_i32, %arg0 : i32, i32
  }
}

module attributes {stable_mosaic.version = 11 : i64} {
  func.func @_conv_relu_maxpool_kernel(%arg0: i32, %arg1: memref<4x36x128xbf16, #tpu.memory_space<vmem>>, %arg2: memref<8x36xbf16, #tpu.memory_space<vmem>>, %arg3: memref<8x1xf32, #tpu.memory_space<vmem>>, %arg4: memref<8x128xbf16, #tpu.memory_space<vmem>>) attributes {dimension_semantics = [#tpu.dimension_semantics<parallel>], iteration_bounds = array<i64: 1>, scalar_prefetch = 0 : i64, scratch_operands = 0 : i64, tpu.core_type = #tpu.core_type<tc>, window_params = [{transform_indices = @transform_0, window_bounds = array<i64: 4, 36, 128>}, {pipeline_mode = #tpu.pipeline_mode<synchronous>, transform_indices = @transform_1, window_bounds = array<i64: 8, 36>}, {pipeline_mode = #tpu.pipeline_mode<synchronous>, transform_indices = @transform_2, window_bounds = array<i64: 8, 1>}, {transform_indices = @transform_3, window_bounds = array<i64: 8, 128>}]} {
    %c0 = arith.constant 0 : index
    %c0_0 = arith.constant 0 : index
    %0 = vector.load %arg2[%c0, %c0_0] : memref<8x36xbf16, #tpu.memory_space<vmem>>, vector<8x36xbf16>
    %c0_1 = arith.constant 0 : index
    %c0_2 = arith.constant 0 : index
    %c0_3 = arith.constant 0 : index
    %1 = vector.load %arg1[%c0_1, %c0_2, %c0_3] : memref<4x36x128xbf16, #tpu.memory_space<vmem>>, vector<1x36x128xbf16>
    %2 = vector.shape_cast %1 : vector<1x36x128xbf16> to vector<36x128xbf16>
    %cst = arith.constant dense<0.000000e+00> : vector<8x128xf32>
    %3 = tpu.matmul %0, %2, %cst {dimension_numbers = #tpu.dot_dimension_numbers<[1], [0], [0], [1], [0, 0, 1, 1], [], []>} : vector<8x36xbf16>, vector<36x128xbf16>, vector<8x128xf32> -> vector<8x128xf32>
    %c1 = arith.constant 1 : index
    %c0_4 = arith.constant 0 : index
    %c0_5 = arith.constant 0 : index
    %4 = vector.load %arg1[%c1, %c0_4, %c0_5] : memref<4x36x128xbf16, #tpu.memory_space<vmem>>, vector<1x36x128xbf16>
    %5 = vector.shape_cast %4 : vector<1x36x128xbf16> to vector<36x128xbf16>
    %cst_6 = arith.constant dense<0.000000e+00> : vector<8x128xf32>
    %6 = tpu.matmul %0, %5, %cst_6 {dimension_numbers = #tpu.dot_dimension_numbers<[1], [0], [0], [1], [0, 0, 1, 1], [], []>} : vector<8x36xbf16>, vector<36x128xbf16>, vector<8x128xf32> -> vector<8x128xf32>
    %c2 = arith.constant 2 : index
    %c0_7 = arith.constant 0 : index
    %c0_8 = arith.constant 0 : index
    %7 = vector.load %arg1[%c2, %c0_7, %c0_8] : memref<4x36x128xbf16, #tpu.memory_space<vmem>>, vector<1x36x128xbf16>
    %8 = vector.shape_cast %7 : vector<1x36x128xbf16> to vector<36x128xbf16>
    %cst_9 = arith.constant dense<0.000000e+00> : vector<8x128xf32>
    %9 = tpu.matmul %0, %8, %cst_9 {dimension_numbers = #tpu.dot_dimension_numbers<[1], [0], [0], [1], [0, 0, 1, 1], [], []>} : vector<8x36xbf16>, vector<36x128xbf16>, vector<8x128xf32> -> vector<8x128xf32>
    %c3 = arith.constant 3 : index
    %c0_10 = arith.constant 0 : index
    %c0_11 = arith.constant 0 : index
    %10 = vector.load %arg1[%c3, %c0_10, %c0_11] : memref<4x36x128xbf16, #tpu.memory_space<vmem>>, vector<1x36x128xbf16>
    %11 = vector.shape_cast %10 : vector<1x36x128xbf16> to vector<36x128xbf16>
    %cst_12 = arith.constant dense<0.000000e+00> : vector<8x128xf32>
    %12 = tpu.matmul %0, %11, %cst_12 {dimension_numbers = #tpu.dot_dimension_numbers<[1], [0], [0], [1], [0, 0, 1, 1], [], []>} : vector<8x36xbf16>, vector<36x128xbf16>, vector<8x128xf32> -> vector<8x128xf32>
    %13 = arith.maximumf %3, %6 : vector<8x128xf32>
    %14 = arith.maximumf %13, %9 : vector<8x128xf32>
    %15 = arith.maximumf %14, %12 : vector<8x128xf32>
    %c0_13 = arith.constant 0 : index
    %c0_14 = arith.constant 0 : index
    %16 = vector.load %arg3[%c0_13, %c0_14] : memref<8x1xf32, #tpu.memory_space<vmem>>, vector<8x1xf32>
    %17 = vector.broadcast %16 : vector<8x1xf32> to vector<8x128xf32>
    %18 = arith.addf %15, %17 : vector<8x128xf32>
    %cst_15 = arith.constant 0.000000e+00 : f32
    %19 = vector.broadcast %cst_15 : f32 to vector<8x128xf32>
    %20 = arith.maximumf %18, %19 : vector<8x128xf32>
    %21 = arith.truncf %20 : vector<8x128xf32> to vector<8x128xbf16>
    %c0_16 = arith.constant 0 : index
    %c0_17 = arith.constant 0 : index
    %22 = vector.load %arg4[%c0_16, %c0_17] : memref<8x128xbf16, #tpu.memory_space<vmem>>, vector<8x128xbf16>
    tpu.vector_store %arg4[%c0_16, %c0_17], %21 {strides = array<i32>} : memref<8x128xbf16, #tpu.memory_space<vmem>>, vector<8x128xbf16>,
    return
  }
  func.func @transform_0(%arg0: i32) -> (i32, i32, i32) {
    %c0_i32 = arith.constant 0 : i32
    %c0_i32_0 = arith.constant 0 : i32
    %c0_i32_1 = arith.constant 0 : i32
    return %c0_i32, %c0_i32_0, %arg0 : i32, i32, i32
  }
  func.func @transform_1(%arg0: i32) -> (i32, i32) {
    %c0_i32 = arith.constant 0 : i32
    %c0_i32_0 = arith.constant 0 : i32
    %c0_i32_1 = arith.constant 0 : i32
    return %c0_i32, %c0_i32_0 : i32, i32
  }
  func.func @transform_2(%arg0: i32) -> (i32, i32) {
    %c0_i32 = arith.constant 0 : i32
    %c0_i32_0 = arith.constant 0 : i32
    %c0_i32_1 = arith.constant 0 : i32
    return %c0_i32, %c0_i32_0 : i32, i32
  }
  func.func @transform_3(%arg0: i32) -> (i32, i32) {
    %c0_i32 = arith.constant 0 : i32
    %c0_i32_0 = arith.constant 0 : i32
    return %c0_i32, %arg0 : i32, i32
  }
}

module attributes {stable_mosaic.version = 11 : i64} {
  func.func @_mlp_softmax_kernel(%arg0: i32, %arg1: memref<8x128xbf16, #tpu.memory_space<vmem>>, %arg2: memref<128x128xbf16, #tpu.memory_space<vmem>>, %arg3: memref<1x128xf32, #tpu.memory_space<vmem>>, %arg4: memref<128x128xbf16, #tpu.memory_space<vmem>>, %arg5: memref<1x128xf32, #tpu.memory_space<vmem>>, %arg6: memref<8x128xf32, #tpu.memory_space<vmem>>) attributes {dimension_semantics = [#tpu.dimension_semantics<parallel>], iteration_bounds = array<i64: 1>, scalar_prefetch = 0 : i64, scratch_operands = 0 : i64, tpu.core_type = #tpu.core_type<tc>, window_params = [{transform_indices = @transform_0, window_bounds = array<i64: 8, 128>}, {pipeline_mode = #tpu.pipeline_mode<synchronous>, transform_indices = @transform_1, window_bounds = array<i64: 128, 128>}, {pipeline_mode = #tpu.pipeline_mode<synchronous>, transform_indices = @transform_2, window_bounds = array<i64: 1, 128>}, {pipeline_mode = #tpu.pipeline_mode<synchronous>, transform_indices = @transform_3, window_bounds = array<i64: 128, 128>}, {pipeline_mode = #tpu.pipeline_mode<synchronous>, transform_indices = @transform_4, window_bounds = array<i64: 1, 128>}, {transform_indices = @transform_5, window_bounds = array<i64: 8, 128>}]} {
    %c0 = arith.constant 0 : index
    %c0_0 = arith.constant 0 : index
    %0 = vector.load %arg1[%c0, %c0_0] : memref<8x128xbf16, #tpu.memory_space<vmem>>, vector<8x128xbf16>
    %c0_1 = arith.constant 0 : index
    %c0_2 = arith.constant 0 : index
    %1 = vector.load %arg2[%c0_1, %c0_2] : memref<128x128xbf16, #tpu.memory_space<vmem>>, vector<128x128xbf16>
    %cst = arith.constant dense<0.000000e+00> : vector<8x128xf32>
    %2 = tpu.matmul %0, %1, %cst {dimension_numbers = #tpu.dot_dimension_numbers<[1], [0], [0], [1], [0, 0, 1, 1], [], []>} : vector<8x128xbf16>, vector<128x128xbf16>, vector<8x128xf32> -> vector<8x128xf32>
    %c0_3 = arith.constant 0 : index
    %c0_4 = arith.constant 0 : index
    %3 = vector.load %arg3[%c0_3, %c0_4] : memref<1x128xf32, #tpu.memory_space<vmem>>, vector<1x128xf32>
    %4 = vector.broadcast %3 : vector<1x128xf32> to vector<8x128xf32>
    %5 = arith.addf %2, %4 : vector<8x128xf32>
    %cst_5 = arith.constant 0.000000e+00 : f32
    %6 = vector.broadcast %cst_5 : f32 to vector<8x128xf32>
    %7 = arith.maximumf %5, %6 : vector<8x128xf32>
    %8 = arith.truncf %7 : vector<8x128xf32> to vector<8x128xbf16>
    %c0_6 = arith.constant 0 : index
    %c0_7 = arith.constant 0 : index
    %9 = vector.load %arg4[%c0_6, %c0_7] : memref<128x128xbf16, #tpu.memory_space<vmem>>, vector<128x128xbf16>
    %cst_8 = arith.constant dense<0.000000e+00> : vector<8x128xf32>
    %10 = tpu.matmul %8, %9, %cst_8 {dimension_numbers = #tpu.dot_dimension_numbers<[1], [0], [0], [1], [0, 0, 1, 1], [], []>} : vector<8x128xbf16>, vector<128x128xbf16>, vector<8x128xf32> -> vector<8x128xf32>
    %c0_9 = arith.constant 0 : index
    %c0_10 = arith.constant 0 : index
    %11 = vector.load %arg5[%c0_9, %c0_10] : memref<1x128xf32, #tpu.memory_space<vmem>>, vector<1x128xf32>
    %12 = vector.broadcast %11 : vector<1x128xf32> to vector<8x128xf32>
    %13 = arith.addf %10, %12 : vector<8x128xf32>
    %cst_11 = arith.constant dense<0xFF800000> : vector<8xf32>
    %14 = vector.multi_reduction <maximumf>, %13, %cst_11 [1] : vector<8x128xf32> to vector<8xf32>
    %15 = vector.shape_cast %14 : vector<8xf32> to vector<8x1xf32>
    %16 = vector.broadcast %15 : vector<8x1xf32> to vector<8x128xf32>
    %17 = arith.subf %13, %16 : vector<8x128xf32>
    %18 = math.exp %17 : vector<8x128xf32>
    %cst_12 = arith.constant dense<0.000000e+00> : vector<8xf32>
    %19 = vector.multi_reduction <add>, %18, %cst_12 [1] : vector<8x128xf32> to vector<8xf32>
    %20 = vector.shape_cast %19 : vector<8xf32> to vector<8x1xf32>
    %21 = vector.broadcast %20 : vector<8x1xf32> to vector<8x128xf32>
    %22 = arith.divf %18, %21 : vector<8x128xf32>
    %c0_13 = arith.constant 0 : index
    %c0_14 = arith.constant 0 : index
    %23 = vector.load %arg6[%c0_13, %c0_14] : memref<8x128xf32, #tpu.memory_space<vmem>>, vector<8x128xf32>
    tpu.vector_store %arg6[%c0_13, %c0_14], %22 {strides = array<i32>} : memref<8x128xf32, #tpu.memory_space<vmem>>, vector<8x128xf32>,
    return
  }
  func.func @transform_0(%arg0: i32) -> (i32, i32) {
    %c0_i32 = arith.constant 0 : i32
    %c0_i32_0 = arith.constant 0 : i32
    return %arg0, %c0_i32 : i32, i32
  }
  func.func @transform_1(%arg0: i32) -> (i32, i32) {
    %c0_i32 = arith.constant 0 : i32
    %c0_i32_0 = arith.constant 0 : i32
    %c0_i32_1 = arith.constant 0 : i32
    return %c0_i32, %c0_i32_0 : i32, i32
  }
  func.func @transform_2(%arg0: i32) -> (i32, i32) {
    %c0_i32 = arith.constant 0 : i32
    %c0_i32_0 = arith.constant 0 : i32
    %c0_i32_1 = arith.constant 0 : i32
    return %c0_i32, %c0_i32_0 : i32, i32
  }
  func.func @transform_3(%arg0: i32) -> (i32, i32) {
    %c0_i32 = arith.constant 0 : i32
    %c0_i32_0 = arith.constant 0 : i32
    %c0_i32_1 = arith.constant 0 : i32
    return %c0_i32, %c0_i32_0 : i32, i32
  }
  func.func @transform_4(%arg0: i32) -> (i32, i32) {
    %c0_i32 = arith.constant 0 : i32
    %c0_i32_0 = arith.constant 0 : i32
    %c0_i32_1 = arith.constant 0 : i32
    return %c0_i32, %c0_i32_0 : i32, i32
  }
  func.func @transform_5(%arg0: i32) -> (i32, i32) {
    %c0_i32 = arith.constant 0 : i32
    %c0_i32_0 = arith.constant 0 : i32
    return %arg0, %c0_i32 : i32, i32
  }
}

</mosaic_0001>

<llo_original>
// kernel: simple_cnn_forward.3
$region0: #{simple_cnn_forward.3}
  #allocation0 [shape = 'u32[]', space=smem, size = 0x4, offset = 0x4, fixed_abs, tag = 'smem constant byte address 0x4 - core index']
  #allocation1 [shape = 'u32[144,128]{1,0:T(1,128)}', space=vmem, size = 0x12000, scoped, tag = 'internal scratch']
  %s0 = inlined_call_operand.vmem [shape: bf16[4,9,128], index: 0, kind: input, shape index: {}]
  %s1 = inlined_call_operand.vmem [shape: bf16[8,9], index: 1, kind: input, shape index: {}]
  %s2 = inlined_call_operand.vmem [shape: f32[8,1], index: 2, kind: input, shape index: {}]
  %s3 = inlined_call_operand.vmem [shape: bf16[8,128], index: 3, kind: output, shape index: {}]
  %s4 = sld [smem:[#allocation0]]
  $region22: #{simple_cnn_forward.3} parent=0
    _
  %s6 = ssub.s32 1, %s4
  %s7 = scalar_select 0, %s6, %s4
  // Predicated region
  $region2: #{simple_cnn_forward.3} parent=0 // pred_check
    _
  $region3: #{simple_cnn_forward.3} parent=0 // pred_check_branch
    %9 = sbr.rel (0) target = $region5
  $region4: #{simple_cnn_forward.3} parent=0 // pred_region
    _
  $region5: #{simple_cnn_forward.3} parent=0 // pred_fallthru
    _
  // Predicated region
  $region6: #{simple_cnn_forward.3} parent=0 // pred_check
    _
  $region7: #{simple_cnn_forward.3} parent=0 // pred_check_branch
    %11 = sbr.rel (0) target = $region9
  $region8: #{simple_cnn_forward.3} parent=0 // pred_region
    _
  $region9: #{simple_cnn_forward.3} parent=0 // pred_fallthru
    _
  // Predicated region
  $region10: #{simple_cnn_forward.3} parent=0 // pred_check
    _
  $region11: #{simple_cnn_forward.3} parent=0 // pred_check_branch
    %13 = sbr.rel (0) target = $region13
  $region12: #{simple_cnn_forward.3} parent=0 // pred_region
    _
  $region13: #{simple_cnn_forward.3} parent=0 // pred_fallthru
    _
  %v15 = vld [vmem:[%s1] sm:$0xf]
  %v16 = vld [vmem:[%s0] sm:$0xf]
  %v17 = vld [vmem:[%s0 + $0x4] sm:$0x1]
  %v20 = vunpack.c.l.b16 %v16
  %v21 = vunpack.c.l.b16 %v17
  %v22 = vpack.c.b16 %v21, %v20
  %vm23 = vcmask 72704
  %v25 = vsel %vm23, %v15, 0
  %vm27 = vcmask 1043456
  %vm28 = vcmask 1044480
  %v29 = vsel %vm27, 4294967295, 65535
  %v30 = vsel %vm28, %v29, 0
  %v32 = vand.u32 %v22, %v30
  %34 = vmatprep.subr.bf16.mxu0 0
  %35 = vmatpush1.bf16.msra.mxu0 0
  %36 = vmatprep.subr.bf16.mxu0 0
  %37 = vmatpush1.bf16.msra.mxu0 0
  %38 = vmatprep.subr.bf16.mxu0 0
  %39 = vmatpush1.bf16.msra.mxu0 0
  %40 = vmatprep.subr.bf16.mxu0 0
  %41 = vmatpush1.bf16.msra.mxu0 0
  %42 = vmatprep.subr.bf16.mxu0 0
  %43 = vmatpush1.bf16.msra.mxu0 0
  %44 = vmatprep.subr.bf16.mxu0 0
  %45 = vmatpush1.bf16.msra.mxu0 0
  %46 = vmatprep.subr.bf16.mxu0 0
  %47 = vmatpush1.bf16.msra.mxu0 0
  %48 = vmatprep.subr.bf16.mxu0 0
  %49 = vmatpush1.bf16.msra.mxu0 %v32
  %50 = vmatprep.subr.bf16.mxu0 0
  %51 = vmatpush2.bf16.msra.mxu0 0
  %52 = vmatprep.subr.bf16.mxu0 0
  %53 = vmatpush2.bf16.msra.mxu0 0
  %54 = vmatprep.subr.bf16.mxu0 0
  %55 = vmatpush2.bf16.msra.mxu0 0
  %56 = vmatprep.subr.bf16.mxu0 0
  %57 = vmatpush2.bf16.msra.mxu0 0
  %58 = vmatprep.subr.bf16.mxu0 0
  %59 = vmatpush2.bf16.msra.mxu0 0
  %60 = vmatprep.subr.bf16.mxu0 0
  %61 = vmatpush2.bf16.msra.mxu0 0
  %62 = vmatprep.subr.bf16.mxu0 0
  %63 = vmatpush2.bf16.msra.mxu0 0
  %64 = vmatprep.subr.bf16.mxu0 0
  %65 = vmatpush2.bf16.msra.mxu0 0
  %66 = vmatprep.mubr.bf16.mxu0 0
  %67 = vmatmul.mubr.bf16.gmra.mxu0 %v25
  %v68 = vpop.f32.mrf.mxu0
  %v69 = vadd.f32 0.0, %v68
  %v70 = vpop.f32.mrf.mxu0
  %v71 = vpop.f32.mrf.mxu0
  %v72 = vpop.f32.mrf.mxu0
  %73 = vdwg.mxu0
  %s74 = scalar_lea.vmem %s0, 8
  %v75 = vld [vmem:[%s74] sm:$0xf]
  %v76 = vld [vmem:[%s74 + $0x4] sm:$0x1]
  %v79 = vunpack.c.l.b16 %v75
  %v80 = vunpack.c.l.b16 %v76
  %v81 = vpack.c.b16 %v80, %v79
  %v83 = vand.u32 %v81, %v30
  %85 = vmatprep.subr.bf16.mxu0 0
  %86 = vmatpush1.bf16.msra.mxu0 0
  %87 = vmatprep.subr.bf16.mxu0 0
  %88 = vmatpush1.bf16.msra.mxu0 0
  %89 = vmatprep.subr.bf16.mxu0 0
  %90 = vmatpush1.bf16.msra.mxu0 0
  %91 = vmatprep.subr.bf16.mxu0 0
  %92 = vmatpush1.bf16.msra.mxu0 0
  %93 = vmatprep.subr.bf16.mxu0 0
  %94 = vmatpush1.bf16.msra.mxu0 0
  %95 = vmatprep.subr.bf16.mxu0 0
  %96 = vmatpush1.bf16.msra.mxu0 0
  %97 = vmatprep.subr.bf16.mxu0 0
  %98 = vmatpush1.bf16.msra.mxu0 0
  %99 = vmatprep.subr.bf16.mxu0 0
  %100 = vmatpush1.bf16.msra.mxu0 %v83
  %101 = vmatprep.subr.bf16.mxu0 0
  %102 = vmatpush2.bf16.msra.mxu0 0
  %103 = vmatprep.subr.bf16.mxu0 0
  %104 = vmatpush2.bf16.msra.mxu0 0
  %105 = vmatprep.subr.bf16.mxu0 0
  %106 = vmatpush2.bf16.msra.mxu0 0
  %107 = vmatprep.subr.bf16.mxu0 0
  %108 = vmatpush2.bf16.msra.mxu0 0
  %109 = vmatprep.subr.bf16.mxu0 0
  %110 = vmatpush2.bf16.msra.mxu0 0
  %111 = vmatprep.subr.bf16.mxu0 0
  %112 = vmatpush2.bf16.msra.mxu0 0
  %113 = vmatprep.subr.bf16.mxu0 0
  %114 = vmatpush2.bf16.msra.mxu0 0
  %115 = vmatprep.subr.bf16.mxu0 0
  %116 = vmatpush2.bf16.msra.mxu0 0
  %117 = vmatprep.mubr.bf16.mxu0 0
  %118 = vmatmul.mubr.bf16.gmra.mxu0 %v25
  %v119 = vpop.f32.mrf.mxu0
  %v120 = vadd.f32 0.0, %v119
  %v121 = vpop.f32.mrf.mxu0
  %v122 = vpop.f32.mrf.mxu0
  %v123 = vpop.f32.mrf.mxu0
  %124 = vdwg.mxu0
  %s125 = scalar_lea.vmem %s0, 16
  %v126 = vld [vmem:[%s125] sm:$0xf]
  %v127 = vld [vmem:[%s125 + $0x4] sm:$0x1]
  %v130 = vunpack.c.l.b16 %v126
  %v131 = vunpack.c.l.b16 %v127
  %v132 = vpack.c.b16 %v131, %v130
  %v134 = vand.u32 %v132, %v30
  %136 = vmatprep.subr.bf16.mxu0 0
  %137 = vmatpush1.bf16.msra.mxu0 0
  %138 = vmatprep.subr.bf16.mxu0 0
  %139 = vmatpush1.bf16.msra.mxu0 0
  %140 = vmatprep.subr.bf16.mxu0 0
  %141 = vmatpush1.bf16.msra.mxu0 0
  %142 = vmatprep.subr.bf16.mxu0 0
  %143 = vmatpush1.bf16.msra.mxu0 0
  %144 = vmatprep.subr.bf16.mxu0 0
  %145 = vmatpush1.bf16.msra.mxu0 0
  %146 = vmatprep.subr.bf16.mxu0 0
  %147 = vmatpush1.bf16.msra.mxu0 0
  %148 = vmatprep.subr.bf16.mxu0 0
  %149 = vmatpush1.bf16.msra.mxu0 0
  %150 = vmatprep.subr.bf16.mxu0 0
  %151 = vmatpush1.bf16.msra.mxu0 %v134
  %152 = vmatprep.subr.bf16.mxu0 0
  %153 = vmatpush2.bf16.msra.mxu0 0
  %154 = vmatprep.subr.bf16.mxu0 0
  %155 = vmatpush2.bf16.msra.mxu0 0
  %156 = vmatprep.subr.bf16.mxu0 0
  %157 = vmatpush2.bf16.msra.mxu0 0
  %158 = vmatprep.subr.bf16.mxu0 0
  %159 = vmatpush2.bf16.msra.mxu0 0
  %160 = vmatprep.subr.bf16.mxu0 0
  %161 = vmatpush2.bf16.msra.mxu0 0
  %162 = vmatprep.subr.bf16.mxu0 0
  %163 = vmatpush2.bf16.msra.mxu0 0
  %164 = vmatprep.subr.bf16.mxu0 0
  %165 = vmatpush2.bf16.msra.mxu0 0
  %166 = vmatprep.subr.bf16.mxu0 0
  %167 = vmatpush2.bf16.msra.mxu0 0
  %168 = vmatprep.mubr.bf16.mxu0 0
  %169 = vmatmul.mubr.bf16.gmra.mxu0 %v25
  %v170 = vpop.f32.mrf.mxu0
  %v171 = vadd.f32 0.0, %v170
  %v172 = vpop.f32.mrf.mxu0
  %v173 = vpop.f32.mrf.mxu0
  %v174 = vpop.f32.mrf.mxu0
  %175 = vdwg.mxu0
  %s176 = scalar_lea.vmem %s0, 24
  %v177 = vld [vmem:[%s176] sm:$0xf]
  %v178 = vld [vmem:[%s176 + $0x4] sm:$0x1]
  %v181 = vunpack.c.l.b16 %v177
  %v182 = vunpack.c.l.b16 %v178
  %v183 = vpack.c.b16 %v182, %v181
  %v185 = vand.u32 %v183, %v30
  %187 = vmatprep.subr.bf16.mxu0 0
  %188 = vmatpush1.bf16.msra.mxu0 0
  %189 = vmatprep.subr.bf16.mxu0 0
  %190 = vmatpush1.bf16.msra.mxu0 0
  %191 = vmatprep.subr.bf16.mxu0 0
  %192 = vmatpush1.bf16.msra.mxu0 0
  %193 = vmatprep.subr.bf16.mxu0 0
  %194 = vmatpush1.bf16.msra.mxu0 0
  %195 = vmatprep.subr.bf16.mxu0 0
  %196 = vmatpush1.bf16.msra.mxu0 0
  %197 = vmatprep.subr.bf16.mxu0 0
  %198 = vmatpush1.bf16.msra.mxu0 0
  %199 = vmatprep.subr.bf16.mxu0 0
  %200 = vmatpush1.bf16.msra.mxu0 0
  %201 = vmatprep.subr.bf16.mxu0 0
  %202 = vmatpush1.bf16.msra.mxu0 %v185
  %203 = vmatprep.subr.bf16.mxu0 0
  %204 = vmatpush2.bf16.msra.mxu0 0
  %205 = vmatprep.subr.bf16.mxu0 0
  %206 = vmatpush2.bf16.msra.mxu0 0
  %207 = vmatprep.subr.bf16.mxu0 0
  %208 = vmatpush2.bf16.msra.mxu0 0
  %209 = vmatprep.subr.bf16.mxu0 0
  %210 = vmatpush2.bf16.msra.mxu0 0
  %211 = vmatprep.subr.bf16.mxu0 0
  %212 = vmatpush2.bf16.msra.mxu0 0
  %213 = vmatprep.subr.bf16.mxu0 0
  %214 = vmatpush2.bf16.msra.mxu0 0
  %215 = vmatprep.subr.bf16.mxu0 0
  %216 = vmatpush2.bf16.msra.mxu0 0
  %217 = vmatprep.subr.bf16.mxu0 0
  %218 = vmatpush2.bf16.msra.mxu0 0
  %219 = vmatprep.mubr.bf16.mxu0 0
  %220 = vmatmul.mubr.bf16.gmra.mxu0 %v25
  %v221 = vpop.f32.mrf.mxu0
  %v222 = vadd.f32 0.0, %v221
  %v223 = vpop.f32.mrf.mxu0
  %v224 = vpop.f32.mrf.mxu0
  %v225 = vpop.f32.mrf.mxu0
  %226 = vdwg.mxu0
  %v227 = vmax.f32 %v69, %v120
  %v228 = vmax.f32 %v227, %v171
  %v229 = vmax.f32 %v228, %v222
  %v230 = vld [vmem:[%s2] sm:$0xff]
  %232 = vset.pattern.permute.xlu0 0
  %233 = vperm.xlu0 %232, %v230
  %v234 = vpop.permute.xlu0 %233
  %v236 = vadd.f32 %v229, %v234
  %v237 = vmax.f32 %v236, 0.0
  %v238 = vpack.c.bf16 %v237, %v237
  %239 = vst [vmem:[%s3] sm:$0xf] %v238
  // Predicated region
  $region14: #{simple_cnn_forward.3} parent=0 // pred_check
    _
  $region15: #{simple_cnn_forward.3} parent=0 // pred_check_branch
    %241 = sbr.rel (0) target = $region17
  $region16: #{simple_cnn_forward.3} parent=0 // pred_region
    _
  $region17: #{simple_cnn_forward.3} parent=0 // pred_fallthru
    _
  // Predicated region
  $region18: #{simple_cnn_forward.3} parent=0 // pred_check
    _
  $region19: #{simple_cnn_forward.3} parent=0 // pred_check_branch
    %243 = sbr.rel (0) target = $region21
  $region20: #{simple_cnn_forward.3} parent=0 // pred_region
    _
  $region21: #{simple_cnn_forward.3} parent=0 // pred_fallthru
    _

// kernel: simple_cnn_forward.4
$region0: #{simple_cnn_forward.4}
  #allocation0 [shape = 'u32[]', space=smem, size = 0x4, offset = 0x4, fixed_abs, tag = 'smem constant byte address 0x4 - core index']
  #allocation1 [shape = 'u32[144,128]{1,0:T(1,128)}', space=vmem, size = 0x12000, scoped, tag = 'internal scratch']
  %s0 = inlined_call_operand.vmem [shape: bf16[4,36,128], index: 0, kind: input, shape index: {}]
  %s1 = inlined_call_operand.vmem [shape: bf16[8,36], index: 1, kind: input, shape index: {}]
  %s2 = inlined_call_operand.vmem [shape: f32[8,1], index: 2, kind: input, shape index: {}]
  %s3 = inlined_call_operand.vmem [shape: bf16[8,128], index: 3, kind: output, shape index: {}]
  %s4 = sld [smem:[#allocation0]]
  $region22: #{simple_cnn_forward.4} parent=0
    _
  %s6 = ssub.s32 1, %s4
  %s7 = scalar_select 0, %s6, %s4
  // Predicated region
  $region2: #{simple_cnn_forward.4} parent=0 // pred_check
    _
  $region3: #{simple_cnn_forward.4} parent=0 // pred_check_branch
    %9 = sbr.rel (0) target = $region5
  $region4: #{simple_cnn_forward.4} parent=0 // pred_region
    _
  $region5: #{simple_cnn_forward.4} parent=0 // pred_fallthru
    _
  // Predicated region
  $region6: #{simple_cnn_forward.4} parent=0 // pred_check
    _
  $region7: #{simple_cnn_forward.4} parent=0 // pred_check_branch
    %11 = sbr.rel (0) target = $region9
  $region8: #{simple_cnn_forward.4} parent=0 // pred_region
    _
  $region9: #{simple_cnn_forward.4} parent=0 // pred_fallthru
    _
  // Predicated region
  $region10: #{simple_cnn_forward.4} parent=0 // pred_check
    _
  $region11: #{simple_cnn_forward.4} parent=0 // pred_check_branch
    %13 = sbr.rel (0) target = $region13
  $region12: #{simple_cnn_forward.4} parent=0 // pred_region
    _
  $region13: #{simple_cnn_forward.4} parent=0 // pred_fallthru
    _
  %v15 = vld [vmem:[%s1] sm:$0xf]
  %v16 = vld [vmem:[%s0] sm:$0xf]
  %v17 = vld [vmem:[%s0 + $0x4] sm:$0xf]
  %v18 = vld [vmem:[%s0 + $0x8] sm:$0xf]
  %v19 = vld [vmem:[%s0 + $0xc] sm:$0xf]
  %v20 = vld [vmem:[%s0 + $0x10] sm:$0x3]
  %v26 = vunpack.c.l.b16 %v16
  %v27 = vunpack.c.l.b16 %v17
  %v28 = vunpack.c.l.b16 %v18
  %v29 = vunpack.c.l.b16 %v19
  %v30 = vunpack.c.l.b16 %v20
  %v31 = vpack.c.b16 %v27, %v26
  %v32 = vpack.c.b16 %v29, %v28
  %v33 = vpack.c.b16 %v30, %v30
  %vm36 = vcmask 293888
  %v38 = vsel %vm36, %v15, 0
  %vm40 = vcmask 1041408
  %v42 = vsel %vm40, %v33, 0
  %44 = vmatprep.subr.bf16.mxu0 0
  %45 = vmatpush1.bf16.msra.mxu0 0
  %46 = vmatprep.subr.bf16.mxu0 0
  %47 = vmatpush1.bf16.msra.mxu0 0
  %48 = vmatprep.subr.bf16.mxu0 0
  %49 = vmatpush1.bf16.msra.mxu0 0
  %50 = vmatprep.subr.bf16.mxu0 0
  %51 = vmatpush1.bf16.msra.mxu0 0
  %52 = vmatprep.subr.bf16.mxu0 0
  %53 = vmatpush1.bf16.msra.mxu0 0
  %54 = vmatprep.subr.bf16.mxu0 0
  %55 = vmatpush1.bf16.msra.mxu0 %v42
  %56 = vmatprep.subr.bf16.mxu0 0
  %57 = vmatpush1.bf16.msra.mxu0 %v32
  %58 = vmatprep.subr.bf16.mxu0 0
  %59 = vmatpush1.bf16.msra.mxu0 %v31
  %60 = vmatprep.subr.bf16.mxu0 0
  %61 = vmatpush2.bf16.msra.mxu0 0
  %62 = vmatprep.subr.bf16.mxu0 0
  %63 = vmatpush2.bf16.msra.mxu0 0
  %64 = vmatprep.subr.bf16.mxu0 0
  %65 = vmatpush2.bf16.msra.mxu0 0
  %66 = vmatprep.subr.bf16.mxu0 0
  %67 = vmatpush2.bf16.msra.mxu0 0
  %68 = vmatprep.subr.bf16.mxu0 0
  %69 = vmatpush2.bf16.msra.mxu0 0
  %70 = vmatprep.subr.bf16.mxu0 0
  %71 = vmatpush2.bf16.msra.mxu0 0
  %72 = vmatprep.subr.bf16.mxu0 0
  %73 = vmatpush2.bf16.msra.mxu0 0
  %74 = vmatprep.subr.bf16.mxu0 0
  %75 = vmatpush2.bf16.msra.mxu0 0
  %76 = vmatprep.mubr.bf16.mxu0 0
  %77 = vmatmul.mubr.bf16.gmra.mxu0 %v38
  %v78 = vpop.f32.mrf.mxu0
  %v79 = vadd.f32 0.0, %v78
  %v80 = vpop.f32.mrf.mxu0
  %v81 = vpop.f32.mrf.mxu0
  %v82 = vpop.f32.mrf.mxu0
  %83 = vdwg.mxu0
  %s84 = scalar_lea.vmem %s0, 20
  %v85 = vld [vmem:[%s84] sm:$0xf]
  %v86 = vld [vmem:[%s84 + $0x4] sm:$0xf]
  %v87 = vld [vmem:[%s84 + $0x8] sm:$0xf]
  %v88 = vld [vmem:[%s84 + $0xc] sm:$0xf]
  %v89 = vld [vmem:[%s84 + $0x10] sm:$0x3]
  %v95 = vunpack.c.l.b16 %v85
  %v96 = vunpack.c.l.b16 %v86
  %v97 = vunpack.c.l.b16 %v87
  %v98 = vunpack.c.l.b16 %v88
  %v99 = vunpack.c.l.b16 %v89
  %v100 = vpack.c.b16 %v96, %v95
  %v101 = vpack.c.b16 %v98, %v97
  %v102 = vpack.c.b16 %v99, %v99
  %v106 = vsel %vm40, %v102, 0
  %108 = vmatprep.subr.bf16.mxu0 0
  %109 = vmatpush1.bf16.msra.mxu0 0
  %110 = vmatprep.subr.bf16.mxu0 0
  %111 = vmatpush1.bf16.msra.mxu0 0
  %112 = vmatprep.subr.bf16.mxu0 0
  %113 = vmatpush1.bf16.msra.mxu0 0
  %114 = vmatprep.subr.bf16.mxu0 0
  %115 = vmatpush1.bf16.msra.mxu0 0
  %116 = vmatprep.subr.bf16.mxu0 0
  %117 = vmatpush1.bf16.msra.mxu0 0
  %118 = vmatprep.subr.bf16.mxu0 0
  %119 = vmatpush1.bf16.msra.mxu0 %v106
  %120 = vmatprep.subr.bf16.mxu0 0
  %121 = vmatpush1.bf16.msra.mxu0 %v101
  %122 = vmatprep.subr.bf16.mxu0 0
  %123 = vmatpush1.bf16.msra.mxu0 %v100
  %124 = vmatprep.subr.bf16.mxu0 0
  %125 = vmatpush2.bf16.msra.mxu0 0
  %126 = vmatprep.subr.bf16.mxu0 0
  %127 = vmatpush2.bf16.msra.mxu0 0
  %128 = vmatprep.subr.bf16.mxu0 0
  %129 = vmatpush2.bf16.msra.mxu0 0
  %130 = vmatprep.subr.bf16.mxu0 0
  %131 = vmatpush2.bf16.msra.mxu0 0
  %132 = vmatprep.subr.bf16.mxu0 0
  %133 = vmatpush2.bf16.msra.mxu0 0
  %134 = vmatprep.subr.bf16.mxu0 0
  %135 = vmatpush2.bf16.msra.mxu0 0
  %136 = vmatprep.subr.bf16.mxu0 0
  %137 = vmatpush2.bf16.msra.mxu0 0
  %138 = vmatprep.subr.bf16.mxu0 0
  %139 = vmatpush2.bf16.msra.mxu0 0
  %140 = vmatprep.mubr.bf16.mxu0 0
  %141 = vmatmul.mubr.bf16.gmra.mxu0 %v38
  %v142 = vpop.f32.mrf.mxu0
  %v143 = vadd.f32 0.0, %v142
  %v144 = vpop.f32.mrf.mxu0
  %v145 = vpop.f32.mrf.mxu0
  %v146 = vpop.f32.mrf.mxu0
  %147 = vdwg.mxu0
  %s148 = scalar_lea.vmem %s0, 40
  %v149 = vld [vmem:[%s148] sm:$0xf]
  %v150 = vld [vmem:[%s148 + $0x4] sm:$0xf]
  %v151 = vld [vmem:[%s148 + $0x8] sm:$0xf]
  %v152 = vld [vmem:[%s148 + $0xc] sm:$0xf]
  %v153 = vld [vmem:[%s148 + $0x10] sm:$0x3]
  %v159 = vunpack.c.l.b16 %v149
  %v160 = vunpack.c.l.b16 %v150
  %v161 = vunpack.c.l.b16 %v151
  %v162 = vunpack.c.l.b16 %v152
  %v163 = vunpack.c.l.b16 %v153
  %v164 = vpack.c.b16 %v160, %v159
  %v165 = vpack.c.b16 %v162, %v161
  %v166 = vpack.c.b16 %v163, %v163
  %v170 = vsel %vm40, %v166, 0
  %172 = vmatprep.subr.bf16.mxu0 0
  %173 = vmatpush1.bf16.msra.mxu0 0
  %174 = vmatprep.subr.bf16.mxu0 0
  %175 = vmatpush1.bf16.msra.mxu0 0
  %176 = vmatprep.subr.bf16.mxu0 0
  %177 = vmatpush1.bf16.msra.mxu0 0
  %178 = vmatprep.subr.bf16.mxu0 0
  %179 = vmatpush1.bf16.msra.mxu0 0
  %180 = vmatprep.subr.bf16.mxu0 0
  %181 = vmatpush1.bf16.msra.mxu0 0
  %182 = vmatprep.subr.bf16.mxu0 0
  %183 = vmatpush1.bf16.msra.mxu0 %v170
  %184 = vmatprep.subr.bf16.mxu0 0
  %185 = vmatpush1.bf16.msra.mxu0 %v165
  %186 = vmatprep.subr.bf16.mxu0 0
  %187 = vmatpush1.bf16.msra.mxu0 %v164
  %188 = vmatprep.subr.bf16.mxu0 0
  %189 = vmatpush2.bf16.msra.mxu0 0
  %190 = vmatprep.subr.bf16.mxu0 0
  %191 = vmatpush2.bf16.msra.mxu0 0
  %192 = vmatprep.subr.bf16.mxu0 0
  %193 = vmatpush2.bf16.msra.mxu0 0
  %194 = vmatprep.subr.bf16.mxu0 0
  %195 = vmatpush2.bf16.msra.mxu0 0
  %196 = vmatprep.subr.bf16.mxu0 0
  %197 = vmatpush2.bf16.msra.mxu0 0
  %198 = vmatprep.subr.bf16.mxu0 0
  %199 = vmatpush2.bf16.msra.mxu0 0
  %200 = vmatprep.subr.bf16.mxu0 0
  %201 = vmatpush2.bf16.msra.mxu0 0
  %202 = vmatprep.subr.bf16.mxu0 0
  %203 = vmatpush2.bf16.msra.mxu0 0
  %204 = vmatprep.mubr.bf16.mxu0 0
  %205 = vmatmul.mubr.bf16.gmra.mxu0 %v38
  %v206 = vpop.f32.mrf.mxu0
  %v207 = vadd.f32 0.0, %v206
  %v208 = vpop.f32.mrf.mxu0
  %v209 = vpop.f32.mrf.mxu0
  %v210 = vpop.f32.mrf.mxu0
  %211 = vdwg.mxu0
  %s212 = scalar_lea.vmem %s0, 60
  %v213 = vld [vmem:[%s212] sm:$0xf]
  %v214 = vld [vmem:[%s212 + $0x4] sm:$0xf]
  %v215 = vld [vmem:[%s212 + $0x8] sm:$0xf]
  %v216 = vld [vmem:[%s212 + $0xc] sm:$0xf]
  %v217 = vld [vmem:[%s212 + $0x10] sm:$0x3]
  %v223 = vunpack.c.l.b16 %v213
  %v224 = vunpack.c.l.b16 %v214
  %v225 = vunpack.c.l.b16 %v215
  %v226 = vunpack.c.l.b16 %v216
  %v227 = vunpack.c.l.b16 %v217
  %v228 = vpack.c.b16 %v224, %v223
  %v229 = vpack.c.b16 %v226, %v225
  %v230 = vpack.c.b16 %v227, %v227
  %v234 = vsel %vm40, %v230, 0
  %236 = vmatprep.subr.bf16.mxu0 0
  %237 = vmatpush1.bf16.msra.mxu0 0
  %238 = vmatprep.subr.bf16.mxu0 0
  %239 = vmatpush1.bf16.msra.mxu0 0
  %240 = vmatprep.subr.bf16.mxu0 0
  %241 = vmatpush1.bf16.msra.mxu0 0
  %242 = vmatprep.subr.bf16.mxu0 0
  %243 = vmatpush1.bf16.msra.mxu0 0
  %244 = vmatprep.subr.bf16.mxu0 0
  %245 = vmatpush1.bf16.msra.mxu0 0
  %246 = vmatprep.subr.bf16.mxu0 0
  %247 = vmatpush1.bf16.msra.mxu0 %v234
  %248 = vmatprep.subr.bf16.mxu0 0
  %249 = vmatpush1.bf16.msra.mxu0 %v229
  %250 = vmatprep.subr.bf16.mxu0 0
  %251 = vmatpush1.bf16.msra.mxu0 %v228
  %252 = vmatprep.subr.bf16.mxu0 0
  %253 = vmatpush2.bf16.msra.mxu0 0
  %254 = vmatprep.subr.bf16.mxu0 0
  %255 = vmatpush2.bf16.msra.mxu0 0
  %256 = vmatprep.subr.bf16.mxu0 0
  %257 = vmatpush2.bf16.msra.mxu0 0
  %258 = vmatprep.subr.bf16.mxu0 0
  %259 = vmatpush2.bf16.msra.mxu0 0
  %260 = vmatprep.subr.bf16.mxu0 0
  %261 = vmatpush2.bf16.msra.mxu0 0
  %262 = vmatprep.subr.bf16.mxu0 0
  %263 = vmatpush2.bf16.msra.mxu0 0
  %264 = vmatprep.subr.bf16.mxu0 0
  %265 = vmatpush2.bf16.msra.mxu0 0
  %266 = vmatprep.subr.bf16.mxu0 0
  %267 = vmatpush2.bf16.msra.mxu0 0
  %268 = vmatprep.mubr.bf16.mxu0 0
  %269 = vmatmul.mubr.bf16.gmra.mxu0 %v38
  %v270 = vpop.f32.mrf.mxu0
  %v271 = vadd.f32 0.0, %v270
  %v272 = vpop.f32.mrf.mxu0
  %v273 = vpop.f32.mrf.mxu0
  %v274 = vpop.f32.mrf.mxu0
  %275 = vdwg.mxu0
  %v276 = vmax.f32 %v79, %v143
  %v277 = vmax.f32 %v276, %v207
  %v278 = vmax.f32 %v277, %v271
  %v279 = vld [vmem:[%s2] sm:$0xff]
  %281 = vset.pattern.permute.xlu0 0
  %282 = vperm.xlu0 %281, %v279
  %v283 = vpop.permute.xlu0 %282
  %v285 = vadd.f32 %v278, %v283
  %v286 = vmax.f32 %v285, 0.0
  %v287 = vpack.c.bf16 %v286, %v286
  %288 = vst [vmem:[%s3] sm:$0xf] %v287
  // Predicated region
  $region14: #{simple_cnn_forward.4} parent=0 // pred_check
    _
  $region15: #{simple_cnn_forward.4} parent=0 // pred_check_branch
    %290 = sbr.rel (0) target = $region17
  $region16: #{simple_cnn_forward.4} parent=0 // pred_region
    _
  $region17: #{simple_cnn_forward.4} parent=0 // pred_fallthru
    _
  // Predicated region
  $region18: #{simple_cnn_forward.4} parent=0 // pred_check
    _
  $region19: #{simple_cnn_forward.4} parent=0 // pred_check_branch
    %292 = sbr.rel (0) target = $region21
  $region20: #{simple_cnn_forward.4} parent=0 // pred_region
    _
  $region21: #{simple_cnn_forward.4} parent=0 // pred_fallthru
    _

// kernel: simple_cnn_forward.5
$region0: #{simple_cnn_forward.5}
  #allocation0 [shape = 'u32[]', space=smem, size = 0x4, offset = 0x4, fixed_abs, tag = 'smem constant byte address 0x4 - core index']
  #allocation1 [shape = 'u32[144,128]{1,0:T(1,128)}', space=vmem, size = 0x12000, scoped, tag = 'internal scratch']
  %s0 = inlined_call_operand.vmem [shape: bf16[8,128], index: 0, kind: input, shape index: {}]
  %s1 = inlined_call_operand.vmem [shape: bf16[128,128], index: 1, kind: input, shape index: {}]
  %s2 = inlined_call_operand.vmem [shape: f32[1,128], index: 2, kind: input, shape index: {}]
  %s3 = inlined_call_operand.vmem [shape: bf16[128,128], index: 3, kind: input, shape index: {}]
  %s4 = inlined_call_operand.vmem [shape: f32[1,128], index: 4, kind: input, shape index: {}]
  %s5 = inlined_call_operand.vmem [shape: f32[8,128], index: 5, kind: output, shape index: {}]
  %s6 = sld [smem:[#allocation0]]
  $region30: #{simple_cnn_forward.5} parent=0
    _
  %s8 = ssub.s32 1, %s6
  %s9 = scalar_select 0, %s8, %s6
  // Predicated region
  $region2: #{simple_cnn_forward.5} parent=0 // pred_check
    _
  $region3: #{simple_cnn_forward.5} parent=0 // pred_check_branch
    %11 = sbr.rel (0) target = $region5
  $region4: #{simple_cnn_forward.5} parent=0 // pred_region
    _
  $region5: #{simple_cnn_forward.5} parent=0 // pred_fallthru
    _
  // Predicated region
  $region6: #{simple_cnn_forward.5} parent=0 // pred_check
    _
  $region7: #{simple_cnn_forward.5} parent=0 // pred_check_branch
    %13 = sbr.rel (0) target = $region9
  $region8: #{simple_cnn_forward.5} parent=0 // pred_region
    _
  $region9: #{simple_cnn_forward.5} parent=0 // pred_fallthru
    _
  // Predicated region
  $region10: #{simple_cnn_forward.5} parent=0 // pred_check
    _
  $region11: #{simple_cnn_forward.5} parent=0 // pred_check_branch
    %15 = sbr.rel (0) target = $region13
  $region12: #{simple_cnn_forward.5} parent=0 // pred_region
    _
  $region13: #{simple_cnn_forward.5} parent=0 // pred_fallthru
    _
  // Predicated region
  $region14: #{simple_cnn_forward.5} parent=0 // pred_check
    _
  $region15: #{simple_cnn_forward.5} parent=0 // pred_check_branch
    %17 = sbr.rel (0) target = $region17
  $region16: #{simple_cnn_forward.5} parent=0 // pred_region
    _
  $region17: #{simple_cnn_forward.5} parent=0 // pred_fallthru
    _
  // Predicated region
  $region18: #{simple_cnn_forward.5} parent=0 // pred_check
    _
  $region19: #{simple_cnn_forward.5} parent=0 // pred_check_branch
    %19 = sbr.rel (0) target = $region21
  $region20: #{simple_cnn_forward.5} parent=0 // pred_region
    _
  $region21: #{simple_cnn_forward.5} parent=0 // pred_fallthru
    _
  %v21 = vld [vmem:[%s0] sm:$0xf]
  %v22 = vld [vmem:[%s1] sm:$0xf]
  %v23 = vld [vmem:[%s1 + $0x4] sm:$0xf]
  %v24 = vld [vmem:[%s1 + $0x8] sm:$0xf]
  %v25 = vld [vmem:[%s1 + $0xc] sm:$0xf]
  %v26 = vld [vmem:[%s1 + $0x10] sm:$0xf]
  %v27 = vld [vmem:[%s1 + $0x14] sm:$0xf]
  %v28 = vld [vmem:[%s1 + $0x18] sm:$0xf]
  %v29 = vld [vmem:[%s1 + $0x1c] sm:$0xf]
  %v30 = vld [vmem:[%s1 + $0x20] sm:$0xf]
  %v31 = vld [vmem:[%s1 + $0x24] sm:$0xf]
  %v32 = vld [vmem:[%s1 + $0x28] sm:$0xf]
  %v33 = vld [vmem:[%s1 + $0x2c] sm:$0xf]
  %v34 = vld [vmem:[%s1 + $0x30] sm:$0xf]
  %v35 = vld [vmem:[%s1 + $0x34] sm:$0xf]
  %v36 = vld [vmem:[%s1 + $0x38] sm:$0xf]
  %v37 = vld [vmem:[%s1 + $0x3c] sm:$0xf]
  %v38 = vld [vmem:[%s2] sm:$0x1]
  %v40 = vlaneseq
  %v41 = vshrl.u32 %v40, 7
  %v42 = vsub.s32 0, %v41
  %v43 = vrot.slane %v38, %v42
  %v61 = vunpack.c.l.b16 %v22
  %v62 = vunpack.c.l.b16 %v23
  %v63 = vunpack.c.l.b16 %v24
  %v64 = vunpack.c.l.b16 %v25
  %v65 = vunpack.c.l.b16 %v26
  %v66 = vunpack.c.l.b16 %v27
  %v67 = vunpack.c.l.b16 %v28
  %v68 = vunpack.c.l.b16 %v29
  %v69 = vunpack.c.l.b16 %v30
  %v70 = vunpack.c.l.b16 %v31
  %v71 = vunpack.c.l.b16 %v32
  %v72 = vunpack.c.l.b16 %v33
  %v73 = vunpack.c.l.b16 %v34
  %v74 = vunpack.c.l.b16 %v35
  %v75 = vunpack.c.l.b16 %v36
  %v76 = vunpack.c.l.b16 %v37
  %v77 = vpack.c.b16 %v62, %v61
  %v78 = vpack.c.b16 %v64, %v63
  %v79 = vpack.c.b16 %v66, %v65
  %v80 = vpack.c.b16 %v68, %v67
  %v81 = vpack.c.b16 %v70, %v69
  %v82 = vpack.c.b16 %v72, %v71
  %v83 = vpack.c.b16 %v74, %v73
  %v84 = vpack.c.b16 %v76, %v75
  %93 = vmatprep.subr.bf16.mxu0 0
  %94 = vmatpush1.bf16.msra.mxu0 %v84
  %95 = vmatprep.subr.bf16.mxu0 0
  %96 = vmatpush1.bf16.msra.mxu0 %v83
  %97 = vmatprep.subr.bf16.mxu0 0
  %98 = vmatpush1.bf16.msra.mxu0 %v82
  %99 = vmatprep.subr.bf16.mxu0 0
  %100 = vmatpush1.bf16.msra.mxu0 %v81
  %101 = vmatprep.subr.bf16.mxu0 0
  %102 = vmatpush1.bf16.msra.mxu0 %v80
  %103 = vmatprep.subr.bf16.mxu0 0
  %104 = vmatpush1.bf16.msra.mxu0 %v79
  %105 = vmatprep.subr.bf16.mxu0 0
  %106 = vmatpush1.bf16.msra.mxu0 %v78
  %107 = vmatprep.subr.bf16.mxu0 0
  %108 = vmatpush1.bf16.msra.mxu0 %v77
  %109 = vmatprep.subr.bf16.mxu0 0
  %110 = vmatpush2.bf16.msra.mxu0 0
  %111 = vmatprep.subr.bf16.mxu0 0
  %112 = vmatpush2.bf16.msra.mxu0 0
  %113 = vmatprep.subr.bf16.mxu0 0
  %114 = vmatpush2.bf16.msra.mxu0 0
  %115 = vmatprep.subr.bf16.mxu0 0
  %116 = vmatpush2.bf16.msra.mxu0 0
  %117 = vmatprep.subr.bf16.mxu0 0
  %118 = vmatpush2.bf16.msra.mxu0 0
  %119 = vmatprep.subr.bf16.mxu0 0
  %120 = vmatpush2.bf16.msra.mxu0 0
  %121 = vmatprep.subr.bf16.mxu0 0
  %122 = vmatpush2.bf16.msra.mxu0 0
  %123 = vmatprep.subr.bf16.mxu0 0
  %124 = vmatpush2.bf16.msra.mxu0 0
  %125 = vmatprep.mubr.bf16.mxu0 0
  %126 = vmatmul.mubr.bf16.gmra.mxu0 %v21
  %v127 = vpop.f32.mrf.mxu0
  %v128 = vadd.f32 %v43, %v127
  %v129 = vpop.f32.mrf.mxu0
  %v130 = vpop.f32.mrf.mxu0
  %v131 = vpop.f32.mrf.mxu0
  %132 = vdwg.mxu0
  %v133 = vmax.f32 %v128, 0.0
  %v134 = vpack.c.bf16 %v133, %v133
  %v135 = vld [vmem:[%s3] sm:$0xf]
  %v136 = vld [vmem:[%s3 + $0x4] sm:$0xf]
  %v137 = vld [vmem:[%s3 + $0x8] sm:$0xf]
  %v138 = vld [vmem:[%s3 + $0xc] sm:$0xf]
  %v139 = vld [vmem:[%s3 + $0x10] sm:$0xf]
  %v140 = vld [vmem:[%s3 + $0x14] sm:$0xf]
  %v141 = vld [vmem:[%s3 + $0x18] sm:$0xf]
  %v142 = vld [vmem:[%s3 + $0x1c] sm:$0xf]
  %v143 = vld [vmem:[%s3 + $0x20] sm:$0xf]
  %v144 = vld [vmem:[%s3 + $0x24] sm:$0xf]
  %v145 = vld [vmem:[%s3 + $0x28] sm:$0xf]
  %v146 = vld [vmem:[%s3 + $0x2c] sm:$0xf]
  %v147 = vld [vmem:[%s3 + $0x30] sm:$0xf]
  %v148 = vld [vmem:[%s3 + $0x34] sm:$0xf]
  %v149 = vld [vmem:[%s3 + $0x38] sm:$0xf]
  %v150 = vld [vmem:[%s3 + $0x3c] sm:$0xf]
  %v151 = vld [vmem:[%s4] sm:$0x1]
  %v153 = vlaneseq
  %v154 = vshrl.u32 %v153, 7
  %v155 = vsub.s32 0, %v154
  %v156 = vrot.slane %v151, %v155
  %v174 = vunpack.c.l.b16 %v135
  %v175 = vunpack.c.l.b16 %v136
  %v176 = vunpack.c.l.b16 %v137
  %v177 = vunpack.c.l.b16 %v138
  %v178 = vunpack.c.l.b16 %v139
  %v179 = vunpack.c.l.b16 %v140
  %v180 = vunpack.c.l.b16 %v141
  %v181 = vunpack.c.l.b16 %v142
  %v182 = vunpack.c.l.b16 %v143
  %v183 = vunpack.c.l.b16 %v144
  %v184 = vunpack.c.l.b16 %v145
  %v185 = vunpack.c.l.b16 %v146
  %v186 = vunpack.c.l.b16 %v147
  %v187 = vunpack.c.l.b16 %v148
  %v188 = vunpack.c.l.b16 %v149
  %v189 = vunpack.c.l.b16 %v150
  %v190 = vpack.c.b16 %v175, %v174
  %v191 = vpack.c.b16 %v177, %v176
  %v192 = vpack.c.b16 %v179, %v178
  %v193 = vpack.c.b16 %v181, %v180
  %v194 = vpack.c.b16 %v183, %v182
  %v195 = vpack.c.b16 %v185, %v184
  %v196 = vpack.c.b16 %v187, %v186
  %v197 = vpack.c.b16 %v189, %v188
  %206 = vmatprep.subr.bf16.mxu0 0
  %207 = vmatpush1.bf16.msra.mxu0 %v197
  %208 = vmatprep.subr.bf16.mxu0 0
  %209 = vmatpush1.bf16.msra.mxu0 %v196
  %210 = vmatprep.subr.bf16.mxu0 0
  %211 = vmatpush1.bf16.msra.mxu0 %v195
  %212 = vmatprep.subr.bf16.mxu0 0
  %213 = vmatpush1.bf16.msra.mxu0 %v194
  %214 = vmatprep.subr.bf16.mxu0 0
  %215 = vmatpush1.bf16.msra.mxu0 %v193
  %216 = vmatprep.subr.bf16.mxu0 0
  %217 = vmatpush1.bf16.msra.mxu0 %v192
  %218 = vmatprep.subr.bf16.mxu0 0
  %219 = vmatpush1.bf16.msra.mxu0 %v191
  %220 = vmatprep.subr.bf16.mxu0 0
  %221 = vmatpush1.bf16.msra.mxu0 %v190
  %222 = vmatprep.subr.bf16.mxu0 0
  %223 = vmatpush2.bf16.msra.mxu0 0
  %224 = vmatprep.subr.bf16.mxu0 0
  %225 = vmatpush2.bf16.msra.mxu0 0
  %226 = vmatprep.subr.bf16.mxu0 0
  %227 = vmatpush2.bf16.msra.mxu0 0
  %228 = vmatprep.subr.bf16.mxu0 0
  %229 = vmatpush2.bf16.msra.mxu0 0
  %230 = vmatprep.subr.bf16.mxu0 0
  %231 = vmatpush2.bf16.msra.mxu0 0
  %232 = vmatprep.subr.bf16.mxu0 0
  %233 = vmatpush2.bf16.msra.mxu0 0
  %234 = vmatprep.subr.bf16.mxu0 0
  %235 = vmatpush2.bf16.msra.mxu0 0
  %236 = vmatprep.subr.bf16.mxu0 0
  %237 = vmatpush2.bf16.msra.mxu0 0
  %238 = vmatprep.mubr.bf16.mxu0 0
  %239 = vmatmul.mubr.bf16.gmra.mxu0 %v134
  %v240 = vpop.f32.mrf.mxu0
  %v241 = vadd.f32 %v156, %v240
  %v242 = vpop.f32.mrf.mxu0
  %v243 = vpop.f32.mrf.mxu0
  %v244 = vpop.f32.mrf.mxu0
  %245 = vdwg.mxu0
  %246 = vmax.xlane.f32.xlu0 %v241
  %v247 = vpop.xlane.xlu0 %246
  %v248 = vsub.f32 %v241, %v247
  %v249 = vmul.f32 %v248, 1.442695
  %v250 = vpow.pop %v249
  %251 = vadd.xlane.f32.xlu0 %v250
  %v252 = vpop.xlane.xlu0 %251
  %v253 = vrcp.pop %v252
  %v254 = vmul.f32 %v250, %v253
  %255 = vst [vmem:[%s5] sm:$0xff] %v254
  // Predicated region
  $region22: #{simple_cnn_forward.5} parent=0 // pred_check
    _
  $region23: #{simple_cnn_forward.5} parent=0 // pred_check_branch
    %257 = sbr.rel (0) target = $region25
  $region24: #{simple_cnn_forward.5} parent=0 // pred_region
    _
  $region25: #{simple_cnn_forward.5} parent=0 // pred_fallthru
    _
  // Predicated region
  $region26: #{simple_cnn_forward.5} parent=0 // pred_check
    _
  $region27: #{simple_cnn_forward.5} parent=0 // pred_check_branch
    %259 = sbr.rel (0) target = $region29
  $region28: #{simple_cnn_forward.5} parent=0 // pred_region
    _
  $region29: #{simple_cnn_forward.5} parent=0 // pred_fallthru
    _

</llo_original>
